<compile_context>
chip_gen: v7x
topology: tpu7x:2x2x1
jax: 0.10.0
libtpu: 0.0.40
codegen_flags: <defaults>
</compile_context>

<pallas_src>
import jax
import jax.numpy as jnp
from jax.experimental import pallas as pl
from jax.experimental.pallas import tpu as pltpu


def _mlp_softmax_kernel(x_ref, w1_ref, b1_ref, w2_ref, b2_ref, o_ref):
    # x_ref : (TM, in_dim)       f32  (TM rows = TM/10 samples of the batch)
    # w1_ref: (in_dim, out_dim)  bf16 (pre-transposed Linear1 weight, resident)
    # b1_ref: (1, out_dim)       f32  (resident)
    # w2_ref: (out_dim, 10)      bf16 (pre-transposed Linear2 weight, resident)
    # b2_ref: (1, 10)            f32  (resident)
    # o_ref : (TM, 10)           f32
    x = x_ref[...].astype(jnp.bfloat16)                 # cast on VPU, in-kernel

    # linear1 + bias + ReLU (bf16 MXU operands, f32 accumulate / elementwise)
    h = jnp.dot(x, w1_ref[...], preferred_element_type=jnp.float32)
    h = jnp.maximum(h + b1_ref[...], 0.0)
    # Dropout(p=0.2) in eval mode: identity (no masking, no scaling).

    # linear2 + bias
    logits = jnp.dot(h.astype(jnp.bfloat16), w2_ref[...],
                     preferred_element_type=jnp.float32)
    logits = logits + b2_ref[...]

    # numerically stable softmax along last dim (all f32, exact divide)
    m = jnp.max(logits, axis=-1, keepdims=True)
    e = jnp.exp(logits - m)
    o_ref[...] = e / jnp.sum(e, axis=-1, keepdims=True)


def net_forward_batched(xs, w1, b1, w2, b2, *, tm=256):
    """Run B independent Net.forward passes in one pallas_call.

    xs : (B, ...) where each xs[i] has 10 * in_dim elements (viewed as (10, in_dim))
    w1 : (out_dim, in_dim)   torch Linear1 weight
    b1 : (out_dim,)          torch Linear1 bias
    w2 : (10, out_dim)       torch Linear2 weight
    b2 : (10,)               torch Linear2 bias
    returns (B, 10, 10) softmax probabilities (f32).
    """
    out_dim, in_dim = w1.shape
    B = xs.shape[0]
    M = B * 10

    # Flatten the whole batch into the GEMM M dimension; keep f32 (cast in-kernel).
    x2d = jnp.reshape(xs, (M, in_dim)).astype(jnp.float32)

    # Row tile: multiple of 8 sublanes; shrink to a single step for tiny batches.
    if M < tm:
        tm = max(8, ((M + 7) // 8) * 8)
    m_pad = pl.cdiv(M, tm) * tm
    if m_pad != M:
        x2d = jnp.pad(x2d, ((0, m_pad - M), (0, 0)))    # padded rows are sliced off

    # One-time weight prep: transpose + bf16 (tiny; avoids any per-step XLU work).
    w1t = jnp.transpose(w1).astype(jnp.bfloat16)        # (in_dim, out_dim)
    w2t = jnp.transpose(w2).astype(jnp.bfloat16)        # (out_dim, 10)
    b1r = jnp.reshape(b1, (1, out_dim)).astype(jnp.float32)
    b2r = jnp.reshape(b2, (1, 10)).astype(jnp.float32)

    out = pl.pallas_call(
        _mlp_softmax_kernel,
        out_shape=jax.ShapeDtypeStruct((m_pad, 10), jnp.float32),
        grid=(m_pad // tm,),
        in_specs=[
            pl.BlockSpec((tm, in_dim), lambda i: (i, 0)),
            pl.BlockSpec((in_dim, out_dim), lambda i: (0, 0)),   # resident
            pl.BlockSpec((1, out_dim), lambda i: (0, 0)),        # resident
            pl.BlockSpec((out_dim, 10), lambda i: (0, 0)),       # resident
            pl.BlockSpec((1, 10), lambda i: (0, 0)),             # resident
        ],
        out_specs=pl.BlockSpec((tm, 10), lambda i: (i, 0)),
        compiler_params=pltpu.CompilerParams(
            dimension_semantics=("parallel",)),
    )(x2d, w1t, b1r, w2t, b2r)

    return jnp.reshape(out[:M], (B, 10, 10))


def net_forward(x, w1, b1, w2, b2):
    """Single forward matching Net.forward exactly: x.view(10, -1) -> (10, 10)."""
    in_dim = w1.shape[1]
    xs = jnp.reshape(x, (1, 10, in_dim))
    return net_forward_batched(xs, w1, b1, w2, b2)[0]


if __name__ == "__main__":
    in_dim, out_dim, B = 32, 64, 128   # B*10 = 1280 rows -> 5 grid steps at TM=256

    key = jax.random.PRNGKey(0)
    kx, kw1, kb1, kw2, kb2 = jax.random.split(key, 5)

    # B independent inputs, each (2, 5, in_dim) -> view(10, in_dim).
    xs = jax.random.normal(kx, (B, 2, 5, in_dim), dtype=jnp.float32)

    # Deterministic parameter init (uniform, torch-Linear-like bounds).
    bound1 = 1.0 / jnp.sqrt(in_dim)
    w1 = jax.random.uniform(kw1, (out_dim, in_dim), jnp.float32, -bound1, bound1)
    b1 = jax.random.uniform(kb1, (out_dim,), jnp.float32, -bound1, bound1)
    bound2 = 1.0 / jnp.sqrt(out_dim)
    w2 = jax.random.uniform(kw2, (10, out_dim), jnp.float32, -bound2, bound2)
    b2 = jax.random.uniform(kb2, (10,), jnp.float32, -bound2, bound2)

    out_b = net_forward_batched(xs, w1, b1, w2, b2)   # (B, 10, 10)
    out_1 = net_forward(xs[0], w1, b1, w2, b2)        # (10, 10)
    jax.block_until_ready((out_b, out_1))

    assert out_b.shape == (B, 10, 10)
    assert out_1.shape == (10, 10)

    # Softmax rows sum to 1 (exact divide, f32).
    row_sums = jnp.sum(out_b, axis=-1)
    assert bool(jnp.all(jnp.abs(row_sums - 1.0) < 1e-4))

    # Reference mirroring the kernel's numerics (bf16 MXU operands, f32 math).
    def ref_forward_bf16(x):
        x2d = jnp.reshape(x, (10, in_dim)).astype(jnp.bfloat16).astype(jnp.float32)
        w1f = w1.astype(jnp.bfloat16).astype(jnp.float32)
        w2f = w2.astype(jnp.bfloat16).astype(jnp.float32)
        h = jnp.maximum(x2d @ w1f.T + b1, 0.0)
        h = h.astype(jnp.bfloat16).astype(jnp.float32)
        logits = h @ w2f.T + b2
        return jax.nn.softmax(logits, axis=-1)

    ref_b = jax.vmap(ref_forward_bf16)(xs)
    assert bool(jnp.max(jnp.abs(out_b - ref_b)) < 5e-3)
    assert bool(jnp.max(jnp.abs(out_1 - ref_b[0])) < 5e-3)

    # Loose sanity check against the full-f32 torch-equivalent math.
    def ref_forward_f32(x):
        x2d = jnp.reshape(x, (10, in_dim))
        h = jnp.maximum(x2d @ w1.T + b1, 0.0)
        return jax.nn.softmax(h @ w2.T + b2, axis=-1)

    ref_f32 = jax.vmap(ref_forward_f32)(xs)
    assert bool(jnp.max(jnp.abs(out_b - ref_f32)) < 5e-2)

    print("KERNEL_OK")
</pallas_src>

<mosaic_0001>
module attributes {stable_mosaic.version = 11 : i64} {
  func.func @_mlp_softmax_kernel(%arg0: i32, %arg1: memref<256x32xf32, #tpu.memory_space<vmem>>, %arg2: memref<32x64xbf16, #tpu.memory_space<vmem>>, %arg3: memref<1x64xf32, #tpu.memory_space<vmem>>, %arg4: memref<64x10xbf16, #tpu.memory_space<vmem>>, %arg5: memref<1x10xf32, #tpu.memory_space<vmem>>, %arg6: memref<256x10xf32, #tpu.memory_space<vmem>>) attributes {dimension_semantics = [#tpu.dimension_semantics<parallel>], iteration_bounds = array<i64: 5>, scalar_prefetch = 0 : i64, scratch_operands = 0 : i64, tpu.core_type = #tpu.core_type<tc>, window_params = [{transform_indices = @transform_0, window_bounds = array<i64: 256, 32>}, {pipeline_mode = #tpu.pipeline_mode<synchronous>, transform_indices = @transform_1, window_bounds = array<i64: 32, 64>}, {pipeline_mode = #tpu.pipeline_mode<synchronous>, transform_indices = @transform_2, window_bounds = array<i64: 1, 64>}, {pipeline_mode = #tpu.pipeline_mode<synchronous>, transform_indices = @transform_3, window_bounds = array<i64: 64, 10>}, {pipeline_mode = #tpu.pipeline_mode<synchronous>, transform_indices = @transform_4, window_bounds = array<i64: 1, 10>}, {transform_indices = @transform_5, window_bounds = array<i64: 256, 10>}]} {
    %c0 = arith.constant 0 : index
    %c0_0 = arith.constant 0 : index
    %0 = vector.load %arg1[%c0, %c0_0] : memref<256x32xf32, #tpu.memory_space<vmem>>, vector<256x32xf32>
    %1 = arith.truncf %0 : vector<256x32xf32> to vector<256x32xbf16>
    %c0_1 = arith.constant 0 : index
    %c0_2 = arith.constant 0 : index
    %2 = vector.load %arg2[%c0_1, %c0_2] : memref<32x64xbf16, #tpu.memory_space<vmem>>, vector<32x64xbf16>
    %cst = arith.constant dense<0.000000e+00> : vector<256x64xf32>
    %3 = tpu.matmul %1, %2, %cst {dimension_numbers = #tpu.dot_dimension_numbers<[1], [0], [0], [1], [0, 0, 1, 1], [], []>} : vector<256x32xbf16>, vector<32x64xbf16>, vector<256x64xf32> -> vector<256x64xf32>
    %c0_3 = arith.constant 0 : index
    %c0_4 = arith.constant 0 : index
    %4 = vector.load %arg3[%c0_3, %c0_4] : memref<1x64xf32, #tpu.memory_space<vmem>>, vector<1x64xf32>
    %5 = vector.broadcast %4 : vector<1x64xf32> to vector<256x64xf32>
    %6 = arith.addf %3, %5 : vector<256x64xf32>
    %cst_5 = arith.constant 0.000000e+00 : f32
    %7 = vector.broadcast %cst_5 : f32 to vector<256x64xf32>
    %8 = arith.maximumf %6, %7 : vector<256x64xf32>
    %9 = arith.truncf %8 : vector<256x64xf32> to vector<256x64xbf16>
    %c0_6 = arith.constant 0 : index
    %c0_7 = arith.constant 0 : index
    %10 = vector.load %arg4[%c0_6, %c0_7] : memref<64x10xbf16, #tpu.memory_space<vmem>>, vector<64x10xbf16>
    %cst_8 = arith.constant dense<0.000000e+00> : vector<256x10xf32>
    %11 = tpu.matmul %9, %10, %cst_8 {dimension_numbers = #tpu.dot_dimension_numbers<[1], [0], [0], [1], [0, 0, 1, 1], [], []>} : vector<256x64xbf16>, vector<64x10xbf16>, vector<256x10xf32> -> vector<256x10xf32>
    %c0_9 = arith.constant 0 : index
    %c0_10 = arith.constant 0 : index
    %12 = vector.load %arg5[%c0_9, %c0_10] : memref<1x10xf32, #tpu.memory_space<vmem>>, vector<1x10xf32>
    %13 = vector.broadcast %12 : vector<1x10xf32> to vector<256x10xf32>
    %14 = arith.addf %11, %13 : vector<256x10xf32>
    %cst_11 = arith.constant dense<0xFF800000> : vector<256xf32>
    %15 = vector.multi_reduction <maximumf>, %14, %cst_11 [1] : vector<256x10xf32> to vector<256xf32>
    %16 = vector.shape_cast %15 : vector<256xf32> to vector<256x1xf32>
    %17 = vector.broadcast %16 : vector<256x1xf32> to vector<256x10xf32>
    %18 = arith.subf %14, %17 : vector<256x10xf32>
    %19 = math.exp %18 : vector<256x10xf32>
    %cst_12 = arith.constant dense<0.000000e+00> : vector<256xf32>
    %20 = vector.multi_reduction <add>, %19, %cst_12 [1] : vector<256x10xf32> to vector<256xf32>
    %21 = vector.shape_cast %20 : vector<256xf32> to vector<256x1xf32>
    %22 = vector.broadcast %21 : vector<256x1xf32> to vector<256x10xf32>
    %23 = arith.divf %19, %22 : vector<256x10xf32>
    %c0_13 = arith.constant 0 : index
    %c0_14 = arith.constant 0 : index
    %24 = vector.load %arg6[%c0_13, %c0_14] : memref<256x10xf32, #tpu.memory_space<vmem>>, vector<256x10xf32>
    tpu.vector_store %arg6[%c0_13, %c0_14], %23 {strides = array<i32>} : memref<256x10xf32, #tpu.memory_space<vmem>>, vector<256x10xf32>,
    return
  }
  func.func @transform_0(%arg0: i32) -> (i32, i32) {
    %c0_i32 = arith.constant 0 : i32
    %c0_i32_0 = arith.constant 0 : i32
    return %arg0, %c0_i32 : i32, i32
  }
  func.func @transform_1(%arg0: i32) -> (i32, i32) {
    %c0_i32 = arith.constant 0 : i32
    %c0_i32_0 = arith.constant 0 : i32
    %c0_i32_1 = arith.constant 0 : i32
    return %c0_i32, %c0_i32_0 : i32, i32
  }
  func.func @transform_2(%arg0: i32) -> (i32, i32) {
    %c0_i32 = arith.constant 0 : i32
    %c0_i32_0 = arith.constant 0 : i32
    %c0_i32_1 = arith.constant 0 : i32
    return %c0_i32, %c0_i32_0 : i32, i32
  }
  func.func @transform_3(%arg0: i32) -> (i32, i32) {
    %c0_i32 = arith.constant 0 : i32
    %c0_i32_0 = arith.constant 0 : i32
    %c0_i32_1 = arith.constant 0 : i32
    return %c0_i32, %c0_i32_0 : i32, i32
  }
  func.func @transform_4(%arg0: i32) -> (i32, i32) {
    %c0_i32 = arith.constant 0 : i32
    %c0_i32_0 = arith.constant 0 : i32
    %c0_i32_1 = arith.constant 0 : i32
    return %c0_i32, %c0_i32_0 : i32, i32
  }
  func.func @transform_5(%arg0: i32) -> (i32, i32) {
    %c0_i32 = arith.constant 0 : i32
    %c0_i32_0 = arith.constant 0 : i32
    return %arg0, %c0_i32 : i32, i32
  }
}

</mosaic_0001>

<llo_original>
// kernel: tpu_custom_call.1
$region0: #{tpu_custom_call.1}
  #allocation0 [shape = 'u32[]', space=smem, size = 0x4, offset = 0x4, fixed_abs, tag = 'smem constant byte address 0x4 - core index']
  #allocation1 [shape = 'u32[144,128]{1,0:T(1,128)}', space=vmem, size = 0x12000, scoped, tag = 'internal scratch']
  %s0 = inlined_call_operand.vmem [shape: f32[1280,32], index: 0, kind: input, shape index: {}]
  %s1 = inlined_call_operand.vmem [shape: bf16[32,64], index: 1, kind: input, shape index: {}]
  %s2 = inlined_call_operand.vmem [shape: f32[1,64], index: 2, kind: input, shape index: {}]
  %s3 = inlined_call_operand.vmem [shape: bf16[64,10], index: 3, kind: input, shape index: {}]
  %s4 = inlined_call_operand.vmem [shape: f32[1,10], index: 4, kind: input, shape index: {}]
  %s5 = inlined_call_operand.vmem [shape: f32[1280,10], index: 5, kind: output, shape index: {}]
  %s6 = sld [smem:[#allocation0]]
  $region53: #{tpu_custom_call.1} parent=0
    _
  %s8 = ssub.s32 1, %s6
  %s9 = scalar_select 0, %s8, %s6
  loop: start=0, step=1, limit=7
  $region2: #{tpu_custom_call.1} parent=0 // loop_pre_header
    _
  $region3: #{tpu_custom_call.1} parent=0 // loop_header
    %s11 = sphi 0, %s15
    %p12 = scmp.ge.s32.totalorder %s11, 7
    %s21 = sphi 0, %s23
    %s24 = sphi 0, %s21
    %s25 = sphi 0, %s24
    %s41 = sphi 0, %s25
    %s45 = sphi 0, %s45
    %s47 = sphi 0, %s45
    %s48 = sphi 0, %s47
    %s62 = sphi 0, %s48
    %s66 = sphi 0, %s66
    %s68 = sphi 0, %s66
    %s69 = sphi 0, %s68
    %s83 = sphi 0, %s69
    %s87 = sphi 0, %s87
    %s89 = sphi 0, %s87
    %s90 = sphi 0, %s89
    %s104 = sphi 0, %s90
    %s108 = sphi 0, %s108
    %s110 = sphi 0, %s108
    %s111 = sphi 0, %s110
    %s125 = sphi 0, %s111
    %s131 = sphi 0, %s133
    %s134 = sphi 0, %s131
    %s135 = sphi 0, %s134
    %s151 = sphi 0, %s135
  $region4: #{tpu_custom_call.1} parent=0 // loop_header_branch
    %14 = sbr.rel (%p12) target = $region8
  $region5: #{tpu_custom_call.1} parent=0 // loop_body
    %s16 = ssub.s32 %s11, 1
    %s17 = ssub.s32 %s11, 2
    %s18 = sadd.s32 %s11, 1
    %s19 = ssub.s32 %s11, %s18
    %p20 = scmp.eq.s32.totalorder %s19, 0
    %s22 = sadd.s32 %s21, 1
    %s23 = scalar_select %p20, %s21, %s22
    %p26 = pneg %p20
    %p27 = scmp.eq.s32.totalorder %s11, 4
    %p28 = por %p26, %p27
    %p29 = scmp.ne.s32.totalorder %s21, %s24
    %p30 = scmp.eq.s32.totalorder %s11, 0
    %p31 = por %p29, %p30
    %p32 = scmp.ne.s32.totalorder %s21, %s24
    %p33 = scmp.eq.s32.totalorder %s16, 4
    %p34 = por %p32, %p33
    %p35 = scmp.ne.s32.totalorder %s24, %s25
    %p36 = scmp.eq.s32.totalorder %s16, 0
    %p37 = por %p35, %p36
    %p38 = scmp.ne.s32.totalorder %s24, %s25
    %p39 = scmp.eq.s32.totalorder %s17, 4
    %p40 = por %p38, %p39
    %p42 = scmp.ne.s32.totalorder %s25, %s41
    %p43 = scmp.eq.s32.totalorder %s17, 0
    %p44 = por %p42, %p43
    %s46 = sadd.s32 %s45, 1
    %p49 = scmp.eq.s32.totalorder %s11, 4
    %p50 = scmp.ne.s32.totalorder %s45, %s47
    %p51 = scmp.eq.s32.totalorder %s11, 0
    %p52 = por %p50, %p51
    %p53 = scmp.ne.s32.totalorder %s45, %s47
    %p54 = scmp.eq.s32.totalorder %s16, 4
    %p55 = por %p53, %p54
    %p56 = scmp.ne.s32.totalorder %s47, %s48
    %p57 = scmp.eq.s32.totalorder %s16, 0
    %p58 = por %p56, %p57
    %p59 = scmp.ne.s32.totalorder %s47, %s48
    %p60 = scmp.eq.s32.totalorder %s17, 4
    %p61 = por %p59, %p60
    %p63 = scmp.ne.s32.totalorder %s48, %s62
    %p64 = scmp.eq.s32.totalorder %s17, 0
    %p65 = por %p63, %p64
    %s67 = sadd.s32 %s66, 1
    %p70 = scmp.eq.s32.totalorder %s11, 4
    %p71 = scmp.ne.s32.totalorder %s66, %s68
    %p72 = scmp.eq.s32.totalorder %s11, 0
    %p73 = por %p71, %p72
    %p74 = scmp.ne.s32.totalorder %s66, %s68
    %p75 = scmp.eq.s32.totalorder %s16, 4
    %p76 = por %p74, %p75
    %p77 = scmp.ne.s32.totalorder %s68, %s69
    %p78 = scmp.eq.s32.totalorder %s16, 0
    %p79 = por %p77, %p78
    %p80 = scmp.ne.s32.totalorder %s68, %s69
    %p81 = scmp.eq.s32.totalorder %s17, 4
    %p82 = por %p80, %p81
    %p84 = scmp.ne.s32.totalorder %s69, %s83
    %p85 = scmp.eq.s32.totalorder %s17, 0
    %p86 = por %p84, %p85
    %s88 = sadd.s32 %s87, 1
    %p91 = scmp.eq.s32.totalorder %s11, 4
    %p92 = scmp.ne.s32.totalorder %s87, %s89
    %p93 = scmp.eq.s32.totalorder %s11, 0
    %p94 = por %p92, %p93
    %p95 = scmp.ne.s32.totalorder %s87, %s89
    %p96 = scmp.eq.s32.totalorder %s16, 4
    %p97 = por %p95, %p96
    %p98 = scmp.ne.s32.totalorder %s89, %s90
    %p99 = scmp.eq.s32.totalorder %s16, 0
    %p100 = por %p98, %p99
    %p101 = scmp.ne.s32.totalorder %s89, %s90
    %p102 = scmp.eq.s32.totalorder %s17, 4
    %p103 = por %p101, %p102
    %p105 = scmp.ne.s32.totalorder %s90, %s104
    %p106 = scmp.eq.s32.totalorder %s17, 0
    %p107 = por %p105, %p106
    %s109 = sadd.s32 %s108, 1
    %p112 = scmp.eq.s32.totalorder %s11, 4
    %p113 = scmp.ne.s32.totalorder %s108, %s110
    %p114 = scmp.eq.s32.totalorder %s11, 0
    %p115 = por %p113, %p114
    %p116 = scmp.ne.s32.totalorder %s108, %s110
    %p117 = scmp.eq.s32.totalorder %s16, 4
    %p118 = por %p116, %p117
    %p119 = scmp.ne.s32.totalorder %s110, %s111
    %p120 = scmp.eq.s32.totalorder %s16, 0
    %p121 = por %p119, %p120
    %p122 = scmp.ne.s32.totalorder %s110, %s111
    %p123 = scmp.eq.s32.totalorder %s17, 4
    %p124 = por %p122, %p123
    %p126 = scmp.ne.s32.totalorder %s111, %s125
    %p127 = scmp.eq.s32.totalorder %s17, 0
    %p128 = por %p126, %p127
    %s129 = ssub.s32 %s11, %s18
    %p130 = scmp.eq.s32.totalorder %s129, 0
    %s132 = sadd.s32 %s131, 1
    %s133 = scalar_select %p130, %s131, %s132
    %p136 = pneg %p130
    %p137 = scmp.eq.s32.totalorder %s11, 4
    %p138 = por %p136, %p137
    %p139 = scmp.ne.s32.totalorder %s131, %s134
    %p140 = scmp.eq.s32.totalorder %s11, 0
    %p141 = por %p139, %p140
    %p142 = scmp.ne.s32.totalorder %s131, %s134
    %p143 = scmp.eq.s32.totalorder %s16, 4
    %p144 = por %p142, %p143
    %p145 = scmp.ne.s32.totalorder %s134, %s135
    %p146 = scmp.eq.s32.totalorder %s16, 0
    %p147 = por %p145, %p146
    %p148 = scmp.ne.s32.totalorder %s134, %s135
    %p149 = scmp.eq.s32.totalorder %s17, 4
    %p150 = por %p148, %p149
    %p152 = scmp.ne.s32.totalorder %s135, %s151
    %p153 = scmp.eq.s32.totalorder %s17, 0
    %p154 = por %p152, %p153
    %p155 = scmp.le.s32.totalorder 1, %s11
    %p156 = scmp.lt.s32.totalorder %s11, 6
    %p157 = pnand %p155, %p156
    %p158 = pneg %p157
    // Predicated region
    $region9: #{tpu_custom_call.1} parent=5 // pred_check
      _
    $region10: #{tpu_custom_call.1} parent=5 // pred_check_branch
      %160 = sbr.rel (%p157) target = $region12
    $region11: #{tpu_custom_call.1} parent=5 // pred_region
      %s161 = ssub.s32 %s11, 1
      // Predicated region
      $region13: #{tpu_custom_call.1} parent=11 // pred_check
        %p162 = pneg %p58
      $region14: #{tpu_custom_call.1} parent=11 // pred_check_branch
        %164 = sbr.rel (%p162) target = $region16
      $region15: #{tpu_custom_call.1} parent=11 // pred_region
        _
      $region16: #{tpu_custom_call.1} parent=11 // pred_fallthru
        _
      // Predicated region
      $region17: #{tpu_custom_call.1} parent=11 // pred_check
        %p165 = pneg %p79
      $region18: #{tpu_custom_call.1} parent=11 // pred_check_branch
        %167 = sbr.rel (%p165) target = $region20
      $region19: #{tpu_custom_call.1} parent=11 // pred_region
        _
      $region20: #{tpu_custom_call.1} parent=11 // pred_fallthru
        _
      // Predicated region
      $region21: #{tpu_custom_call.1} parent=11 // pred_check
        %p168 = pneg %p100
      $region22: #{tpu_custom_call.1} parent=11 // pred_check_branch
        %170 = sbr.rel (%p168) target = $region24
      $region23: #{tpu_custom_call.1} parent=11 // pred_region
        _
      $region24: #{tpu_custom_call.1} parent=11 // pred_fallthru
        _
      // Predicated region
      $region25: #{tpu_custom_call.1} parent=11 // pred_check
        %p171 = pneg %p121
      $region26: #{tpu_custom_call.1} parent=11 // pred_check_branch
        %173 = sbr.rel (%p171) target = $region28
      $region27: #{tpu_custom_call.1} parent=11 // pred_region
        _
      $region28: #{tpu_custom_call.1} parent=11 // pred_fallthru
        _
    $region12: #{tpu_custom_call.1} parent=5 // pred_fallthru
      _
    %p174 = scmp.lt.s32.totalorder %s11, 5
    // Predicated region
    $region29: #{tpu_custom_call.1} parent=5 // pred_check
      %p175 = pneg %p174
    $region30: #{tpu_custom_call.1} parent=5 // pred_check_branch
      %177 = sbr.rel (%p175) target = $region32
    $region31: #{tpu_custom_call.1} parent=5 // pred_region
      // Predicated region
      $region33: #{tpu_custom_call.1} parent=31 // pred_check
        %p178 = pneg %p31
      $region34: #{tpu_custom_call.1} parent=31 // pred_check_branch
        %180 = sbr.rel (%p178) target = $region36
      $region35: #{tpu_custom_call.1} parent=31 // pred_region
        %s181 = smul.u32 32, %s11
        %p182 = scmp.lt.s32.totalorder %s181, 159
        %s183 = scalar_select %p182, %s181, 159
        %s184 = smul.addr %s183, 8
        %s185 = scalar_lea.vmem %s0, %s184
        %s186 = smul.u32 32, %s11
      $region36: #{tpu_custom_call.1} parent=31 // pred_fallthru
        _
    $region32: #{tpu_custom_call.1} parent=5 // pred_fallthru
      _
    %p187 = scmp.le.s32.totalorder 1, %s11
    %p188 = scmp.lt.s32.totalorder %s11, 6
    %p189 = pnand %p187, %p188
    %p190 = pneg %p189
    // Predicated region
    $region37: #{tpu_custom_call.1} parent=5 // pred_check
      _
    $region38: #{tpu_custom_call.1} parent=5 // pred_check_branch
      %192 = sbr.rel (%p189) target = $region40
    $region39: #{tpu_custom_call.1} parent=5 // pred_region
      %s193 = ssub.s32 %s11, 1
      %s194 = smul.u32 32, %s16
      %p195 = scmp.lt.s32.totalorder %s194, 159
      %s196 = scalar_select %p195, %s194, 159
      %s197 = smul.addr %s196, 8
      %s198 = scalar_lea.vmem %s0, %s197
      %p199 = pneg %p37
      %p200 = pneg %p34
      %p201 = pneg %p58
      %p202 = pneg %p55
      %p203 = pneg %p79
      %p204 = pneg %p76
      %p205 = pneg %p100
      %p206 = pneg %p97
      %p207 = pneg %p121
      %p208 = pneg %p118
      %p209 = pneg %p147
      %p210 = pneg %p144
      %s211 = smul.u32 32, %s16
      %p212 = scmp.lt.s32.totalorder %s211, 159
      %s213 = scalar_select %p212, %s211, 159
      %s214 = smul.addr %s213, 8
      %s215 = scalar_lea.vmem %s5, %s214
      %s216 = smul.u32 32, %s16
      %p217 = scmp.lt.s32.totalorder %s216, 159
      %s218 = scalar_select %p217, %s216, 159
      %s219 = smul.addr %s218, 8
      %s220 = scalar_lea.vmem %s0, %s219
      %s221 = smul.u32 32, %s16
      %s222 = smul.u32 32, %s16
      %p223 = scmp.lt.s32.totalorder %s222, 159
      %s224 = scalar_select %p223, %s222, 159
      %s225 = smul.addr %s224, 8
      %s226 = scalar_lea.vmem %s5, %s225
      %s227 = smul.u32 32, %s16
      %v229 = vld [vmem:[%s220] sm:$0xff]
      %v230 = vld [vmem:[%s220 + $0x8] sm:$0xff]
      %v231 = vld [vmem:[%s220 + $0x10] sm:$0xff]
      %v232 = vld [vmem:[%s220 + $0x18] sm:$0xff]
      %v233 = vld [vmem:[%s220 + $0x20] sm:$0xff]
      %v234 = vld [vmem:[%s220 + $0x28] sm:$0xff]
      %v235 = vld [vmem:[%s220 + $0x30] sm:$0xff]
      %v236 = vld [vmem:[%s220 + $0x38] sm:$0xff]
      %v237 = vld [vmem:[%s220 + $0x40] sm:$0xff]
      %v238 = vld [vmem:[%s220 + $0x48] sm:$0xff]
      %v239 = vld [vmem:[%s220 + $0x50] sm:$0xff]
      %v240 = vld [vmem:[%s220 + $0x58] sm:$0xff]
      %v241 = vld [vmem:[%s220 + $0x60] sm:$0xff]
      %v242 = vld [vmem:[%s220 + $0x68] sm:$0xff]
      %v243 = vld [vmem:[%s220 + $0x70] sm:$0xff]
      %v244 = vld [vmem:[%s220 + $0x78] sm:$0xff]
      %v245 = vld [vmem:[%s220 + $0x80] sm:$0xff]
      %v246 = vld [vmem:[%s220 + $0x88] sm:$0xff]
      %v247 = vld [vmem:[%s220 + $0x90] sm:$0xff]
      %v248 = vld [vmem:[%s220 + $0x98] sm:$0xff]
      %v249 = vld [vmem:[%s220 + $0xa0] sm:$0xff]
      %v250 = vld [vmem:[%s220 + $0xa8] sm:$0xff]
      %v251 = vld [vmem:[%s220 + $0xb0] sm:$0xff]
      %v252 = vld [vmem:[%s220 + $0xb8] sm:$0xff]
      %v253 = vld [vmem:[%s220 + $0xc0] sm:$0xff]
      %v254 = vld [vmem:[%s220 + $0xc8] sm:$0xff]
      %v255 = vld [vmem:[%s220 + $0xd0] sm:$0xff]
      %v256 = vld [vmem:[%s220 + $0xd8] sm:$0xff]
      %v257 = vld [vmem:[%s220 + $0xe0] sm:$0xff]
      %v258 = vld [vmem:[%s220 + $0xe8] sm:$0xff]
      %v259 = vld [vmem:[%s220 + $0xf0] sm:$0xff]
      %v260 = vld [vmem:[%s220 + $0xf8] sm:$0xff]
      %v261 = vpack.c.bf16 %v230, %v229
      %v262 = vpack.c.bf16 %v232, %v231
      %v263 = vpack.c.bf16 %v234, %v233
      %v264 = vpack.c.bf16 %v236, %v235
      %v265 = vpack.c.bf16 %v238, %v237
      %v266 = vpack.c.bf16 %v240, %v239
      %v267 = vpack.c.bf16 %v242, %v241
      %v268 = vpack.c.bf16 %v244, %v243
      %v269 = vpack.c.bf16 %v246, %v245
      %v270 = vpack.c.bf16 %v248, %v247
      %v271 = vpack.c.bf16 %v250, %v249
      %v272 = vpack.c.bf16 %v252, %v251
      %v273 = vpack.c.bf16 %v254, %v253
      %v274 = vpack.c.bf16 %v256, %v255
      %v275 = vpack.c.bf16 %v258, %v257
      %v276 = vpack.c.bf16 %v260, %v259
      %v277 = vld [vmem:[%s1] sm:$0xf]
      %v278 = vld [vmem:[%s1 + $0x4] sm:$0xf]
      %v279 = vld [vmem:[%s1 + $0x8] sm:$0xf]
      %v280 = vld [vmem:[%s1 + $0xc] sm:$0xf]
      %v281 = vld [vmem:[%s2] sm:$0x1]
      %v283 = vlaneseq
      %v284 = vshrl.u32 %v283, 7
      %v285 = vsub.s32 0, %v284
      %v286 = vrot.slane %v281, %v285
      %v292 = vunpack.c.l.b16 %v277
      %v293 = vunpack.c.l.b16 %v278
      %v294 = vunpack.c.l.b16 %v279
      %v295 = vunpack.c.l.b16 %v280
      %v296 = vpack.c.b16 %v293, %v292
      %v297 = vpack.c.b16 %v295, %v294
      %vm300 = vcmask 261120
      %v302 = vsel %vm300, %v261, 0
      %v305 = vsel %vm300, %v262, 0
      %v308 = vsel %vm300, %v263, 0
      %v311 = vsel %vm300, %v264, 0
      %v314 = vsel %vm300, %v265, 0
      %v317 = vsel %vm300, %v266, 0
      %v320 = vsel %vm300, %v267, 0
      %v323 = vsel %vm300, %v268, 0
      %v326 = vsel %vm300, %v269, 0
      %v329 = vsel %vm300, %v270, 0
      %v332 = vsel %vm300, %v271, 0
      %v335 = vsel %vm300, %v272, 0
      %v338 = vsel %vm300, %v273, 0
      %v341 = vsel %vm300, %v274, 0
      %v344 = vsel %vm300, %v275, 0
      %v347 = vsel %vm300, %v276, 0
      %349 = vmatprep.subr.bf16.mxu0 0
      %350 = vmatpush1.bf16.msra.mxu0 %v296
      %351 = vmatprep.subr.bf16.mxu0 0
      %352 = vmatpush1.bf16.msra.mxu0 %v297
      %353 = vmatprep.subr.bf16.mxu0 0
      %354 = vmatpush1.bf16.msra.mxu0 0
      %355 = vmatprep.subr.bf16.mxu0 0
      %356 = vmatpush1.bf16.msra.mxu0 0
      %357 = vmatprep.subr.bf16.mxu0 0
      %358 = vmatpush1.bf16.msra.mxu0 0
      %359 = vmatprep.subr.bf16.mxu0 0
      %360 = vmatpush1.bf16.msra.mxu0 0
      %361 = vmatprep.subr.bf16.mxu0 0
      %362 = vmatpush1.bf16.msra.mxu0 0
      %363 = vmatprep.subr.bf16.mxu0 0
      %364 = vmatpush1.bf16.msra.mxu0 0
      %365 = vmatprep.subr.bf16.mxu0 0
      %366 = vmatpush1.bf16.msra.mxu0 0
      %367 = vmatprep.subr.bf16.mxu0 0
      %368 = vmatpush1.bf16.msra.mxu0 0
      %369 = vmatprep.subr.bf16.mxu0 0
      %370 = vmatpush1.bf16.msra.mxu0 0
      %371 = vmatprep.subr.bf16.mxu0 0
      %372 = vmatpush1.bf16.msra.mxu0 0
      %373 = vmatprep.subr.bf16.mxu0 0
      %374 = vmatpush1.bf16.msra.mxu0 0
      %375 = vmatprep.subr.bf16.mxu0 0
      %376 = vmatpush1.bf16.msra.mxu0 0
      %377 = vmatprep.subr.bf16.mxu0 0
      %378 = vmatpush1.bf16.msra.mxu0 0
      %379 = vmatprep.subr.bf16.mxu0 0
      %380 = vmatpush1.bf16.msra.mxu0 0
      %381 = vmatprep.mubr.bf16.mxu0 0
      %382 = vmatmul.mubr.bf16.gmra.mrb[0].mxu0 %v302
      %v383 = vpop.f32.mrb[0].mxu0
      %v384 = vadd.f32 %v286, %v383
      %v385 = vpop.f32.mrb[0].mxu0
      %v386 = vpop.f32.mrb[0].mxu0
      %v387 = vadd.f32 %v286, %v386
      %v388 = vpop.f32.mrb[0].mxu0
      %389 = vmatprep.mubr.bf16.mxu0 0
      %390 = vmatmul.mubr.bf16.gmra.mrb[0].mxu0 %v305
      %v391 = vpop.f32.mrb[0].mxu0
      %v392 = vadd.f32 %v286, %v391
      %v393 = vpop.f32.mrb[0].mxu0
      %v394 = vpop.f32.mrb[0].mxu0
      %v395 = vadd.f32 %v286, %v394
      %v396 = vpop.f32.mrb[0].mxu0
      %397 = vmatprep.mubr.bf16.mxu0 0
      %398 = vmatmul.mubr.bf16.gmra.mrb[0].mxu0 %v308
      %v399 = vpop.f32.mrb[0].mxu0
      %v400 = vadd.f32 %v286, %v399
      %v401 = vpop.f32.mrb[0].mxu0
      %v402 = vpop.f32.mrb[0].mxu0
      %v403 = vadd.f32 %v286, %v402
      %v404 = vpop.f32.mrb[0].mxu0
      %405 = vmatprep.mubr.bf16.mxu0 0
      %406 = vmatmul.mubr.bf16.gmra.mrb[0].mxu0 %v311
      %v407 = vpop.f32.mrb[0].mxu0
      %v408 = vadd.f32 %v286, %v407
      %v409 = vpop.f32.mrb[0].mxu0
      %v410 = vpop.f32.mrb[0].mxu0
      %v411 = vadd.f32 %v286, %v410
      %v412 = vpop.f32.mrb[0].mxu0
      %413 = vmatprep.mubr.bf16.mxu0 0
      %414 = vmatmul.mubr.bf16.gmra.mrb[0].mxu0 %v314
      %v415 = vpop.f32.mrb[0].mxu0
      %v416 = vadd.f32 %v286, %v415
      %v417 = vpop.f32.mrb[0].mxu0
      %v418 = vpop.f32.mrb[0].mxu0
      %v419 = vadd.f32 %v286, %v418
      %v420 = vpop.f32.mrb[0].mxu0
      %421 = vmatprep.mubr.bf16.mxu0 0
      %422 = vmatmul.mubr.bf16.gmra.mrb[0].mxu0 %v317
      %v423 = vpop.f32.mrb[0].mxu0
      %v424 = vadd.f32 %v286, %v423
      %v425 = vpop.f32.mrb[0].mxu0
      %v426 = vpop.f32.mrb[0].mxu0
      %v427 = vadd.f32 %v286, %v426
      %v428 = vpop.f32.mrb[0].mxu0
      %429 = vmatprep.mubr.bf16.mxu0 0
      %430 = vmatmul.mubr.bf16.gmra.mrb[0].mxu0 %v320
      %v431 = vpop.f32.mrb[0].mxu0
      %v432 = vadd.f32 %v286, %v431
      %v433 = vpop.f32.mrb[0].mxu0
      %v434 = vpop.f32.mrb[0].mxu0
      %v435 = vadd.f32 %v286, %v434
      %v436 = vpop.f32.mrb[0].mxu0
      %437 = vmatprep.mubr.bf16.mxu0 0
      %438 = vmatmul.mubr.bf16.gmra.mrb[0].mxu0 %v323
      %v439 = vpop.f32.mrb[0].mxu0
      %v440 = vadd.f32 %v286, %v439
      %v441 = vpop.f32.mrb[0].mxu0
      %v442 = vpop.f32.mrb[0].mxu0
      %v443 = vadd.f32 %v286, %v442
      %v444 = vpop.f32.mrb[0].mxu0
      %445 = vmatprep.mubr.bf16.mxu0 0
      %446 = vmatmul.mubr.bf16.gmra.mrb[0].mxu0 %v326
      %v447 = vpop.f32.mrb[0].mxu0
      %v448 = vadd.f32 %v286, %v447
      %v449 = vpop.f32.mrb[0].mxu0
      %v450 = vpop.f32.mrb[0].mxu0
      %v451 = vadd.f32 %v286, %v450
      %v452 = vpop.f32.mrb[0].mxu0
      %453 = vmatprep.mubr.bf16.mxu0 0
      %454 = vmatmul.mubr.bf16.gmra.mrb[0].mxu0 %v329
      %v455 = vpop.f32.mrb[0].mxu0
      %v456 = vadd.f32 %v286, %v455
      %v457 = vpop.f32.mrb[0].mxu0
      %v458 = vpop.f32.mrb[0].mxu0
      %v459 = vadd.f32 %v286, %v458
      %v460 = vpop.f32.mrb[0].mxu0
      %461 = vmatprep.mubr.bf16.mxu0 0
      %462 = vmatmul.mubr.bf16.gmra.mrb[0].mxu0 %v332
      %v463 = vpop.f32.mrb[0].mxu0
      %v464 = vadd.f32 %v286, %v463
      %v465 = vpop.f32.mrb[0].mxu0
      %v466 = vpop.f32.mrb[0].mxu0
      %v467 = vadd.f32 %v286, %v466
      %v468 = vpop.f32.mrb[0].mxu0
      %469 = vmatprep.mubr.bf16.mxu0 0
      %470 = vmatmul.mubr.bf16.gmra.mrb[0].mxu0 %v335
      %v471 = vpop.f32.mrb[0].mxu0
      %v472 = vadd.f32 %v286, %v471
      %v473 = vpop.f32.mrb[0].mxu0
      %v474 = vpop.f32.mrb[0].mxu0
      %v475 = vadd.f32 %v286, %v474
      %v476 = vpop.f32.mrb[0].mxu0
      %477 = vmatprep.mubr.bf16.mxu0 0
      %478 = vmatmul.mubr.bf16.gmra.mrb[0].mxu0 %v338
      %v479 = vpop.f32.mrb[0].mxu0
      %v480 = vadd.f32 %v286, %v479
      %v481 = vpop.f32.mrb[0].mxu0
      %v482 = vpop.f32.mrb[0].mxu0
      %v483 = vadd.f32 %v286, %v482
      %v484 = vpop.f32.mrb[0].mxu0
      %485 = vmatprep.mubr.bf16.mxu0 0
      %486 = vmatmul.mubr.bf16.gmra.mrb[0].mxu0 %v341
      %v487 = vpop.f32.mrb[0].mxu0
      %v488 = vadd.f32 %v286, %v487
      %v489 = vpop.f32.mrb[0].mxu0
      %v490 = vpop.f32.mrb[0].mxu0
      %v491 = vadd.f32 %v286, %v490
      %v492 = vpop.f32.mrb[0].mxu0
      %493 = vmatprep.mubr.bf16.mxu0 0
      %494 = vmatmul.mubr.bf16.gmra.mrb[0].mxu0 %v344
      %v495 = vpop.f32.mrb[0].mxu0
      %v496 = vadd.f32 %v286, %v495
      %v497 = vpop.f32.mrb[0].mxu0
      %v498 = vpop.f32.mrb[0].mxu0
      %v499 = vadd.f32 %v286, %v498
      %v500 = vpop.f32.mrb[0].mxu0
      %501 = vmatprep.mubr.bf16.mxu0 0
      %502 = vmatmul.mubr.bf16.gmra.mrb[0].mxu0 %v347
      %v503 = vpop.f32.mrb[0].mxu0
      %v504 = vadd.f32 %v286, %v503
      %v505 = vpop.f32.mrb[0].mxu0
      %v506 = vpop.f32.mrb[0].mxu0
      %v507 = vadd.f32 %v286, %v506
      %v508 = vpop.f32.mrb[0].mxu0
      %509 = vdwg.mxu0
      %v510 = vmax.f32 %v384, 0.0
      %v511 = vmax.f32 %v387, 0.0
      %v512 = vmax.f32 %v392, 0.0
      %v513 = vmax.f32 %v395, 0.0
      %v514 = vmax.f32 %v400, 0.0
      %v515 = vmax.f32 %v403, 0.0
      %v516 = vmax.f32 %v408, 0.0
      %v517 = vmax.f32 %v411, 0.0
      %v518 = vmax.f32 %v416, 0.0
      %v519 = vmax.f32 %v419, 0.0
      %v520 = vmax.f32 %v424, 0.0
      %v521 = vmax.f32 %v427, 0.0
      %v522 = vmax.f32 %v432, 0.0
      %v523 = vmax.f32 %v435, 0.0
      %v524 = vmax.f32 %v440, 0.0
      %v525 = vmax.f32 %v443, 0.0
      %v526 = vmax.f32 %v448, 0.0
      %v527 = vmax.f32 %v451, 0.0
      %v528 = vmax.f32 %v456, 0.0
      %v529 = vmax.f32 %v459, 0.0
      %v530 = vmax.f32 %v464, 0.0
      %v531 = vmax.f32 %v467, 0.0
      %v532 = vmax.f32 %v472, 0.0
      %v533 = vmax.f32 %v475, 0.0
      %v534 = vmax.f32 %v480, 0.0
      %v535 = vmax.f32 %v483, 0.0
      %v536 = vmax.f32 %v488, 0.0
      %v537 = vmax.f32 %v491, 0.0
      %v538 = vmax.f32 %v496, 0.0
      %v539 = vmax.f32 %v499, 0.0
      %v540 = vmax.f32 %v504, 0.0
      %v541 = vmax.f32 %v507, 0.0
      %v542 = vpack.c.bf16 %v511, %v510
      %v543 = vpack.c.bf16 %v513, %v512
      %v544 = vpack.c.bf16 %v515, %v514
      %v545 = vpack.c.bf16 %v517, %v516
      %v546 = vpack.c.bf16 %v519, %v518
      %v547 = vpack.c.bf16 %v521, %v520
      %v548 = vpack.c.bf16 %v523, %v522
      %v549 = vpack.c.bf16 %v525, %v524
      %v550 = vpack.c.bf16 %v527, %v526
      %v551 = vpack.c.bf16 %v529, %v528
      %v552 = vpack.c.bf16 %v531, %v530
      %v553 = vpack.c.bf16 %v533, %v532
      %v554 = vpack.c.bf16 %v535, %v534
      %v555 = vpack.c.bf16 %v537, %v536
      %v556 = vpack.c.bf16 %v539, %v538
      %v557 = vpack.c.bf16 %v541, %v540
      %v558 = vld [vmem:[%s3] sm:$0xf]
      %v559 = vld [vmem:[%s3 + $0x4] sm:$0xf]
      %v560 = vld [vmem:[%s3 + $0x8] sm:$0xf]
      %v561 = vld [vmem:[%s3 + $0xc] sm:$0xf]
      %v562 = vld [vmem:[%s3 + $0x10] sm:$0xf]
      %v563 = vld [vmem:[%s3 + $0x14] sm:$0xf]
      %v564 = vld [vmem:[%s3 + $0x18] sm:$0xf]
      %v565 = vld [vmem:[%s3 + $0x1c] sm:$0xf]
      %v566 = vld [vmem:[%s4] sm:$0x1]
      %v568 = vlaneseq
      %v569 = vshrl.u32 %v568, 7
      %v570 = vsub.s32 0, %v569
      %v571 = vrot.slane %v566, %v570
      %v581 = vunpack.c.l.b16 %v558
      %v582 = vunpack.c.l.b16 %v559
      %v583 = vunpack.c.l.b16 %v560
      %v584 = vunpack.c.l.b16 %v561
      %v585 = vunpack.c.l.b16 %v562
      %v586 = vunpack.c.l.b16 %v563
      %v587 = vunpack.c.l.b16 %v564
      %v588 = vunpack.c.l.b16 %v565
      %v589 = vpack.c.b16 %v582, %v581
      %v590 = vpack.c.b16 %v584, %v583
      %v591 = vpack.c.b16 %v586, %v585
      %v592 = vpack.c.b16 %v588, %v587
      %vm597 = vcmask 523264
      %v599 = vsel %vm597, %v542, 0
      %v602 = vsel %vm597, %v543, 0
      %v605 = vsel %vm597, %v544, 0
      %v608 = vsel %vm597, %v545, 0
      %v611 = vsel %vm597, %v546, 0
      %v614 = vsel %vm597, %v547, 0
      %v617 = vsel %vm597, %v548, 0
      %v620 = vsel %vm597, %v549, 0
      %v623 = vsel %vm597, %v550, 0
      %v626 = vsel %vm597, %v551, 0
      %v629 = vsel %vm597, %v552, 0
      %v632 = vsel %vm597, %v553, 0
      %v635 = vsel %vm597, %v554, 0
      %v638 = vsel %vm597, %v555, 0
      %v641 = vsel %vm597, %v556, 0
      %v644 = vsel %vm597, %v557, 0
      %646 = vmatprep.subr.bf16.mxu0 0
      %647 = vmatpush1.bf16.msra.mxu0 %v589
      %648 = vmatprep.subr.bf16.mxu0 0
      %649 = vmatpush1.bf16.msra.mxu0 %v590
      %650 = vmatprep.subr.bf16.mxu0 0
      %651 = vmatpush1.bf16.msra.mxu0 %v591
      %652 = vmatprep.subr.bf16.mxu0 0
      %653 = vmatpush1.bf16.msra.mxu0 %v592
      %654 = vmatprep.subr.bf16.mxu0 0
      %655 = vmatpush1.bf16.msra.mxu0 0
      %656 = vmatprep.subr.bf16.mxu0 0
      %657 = vmatpush1.bf16.msra.mxu0 0
      %658 = vmatprep.subr.bf16.mxu0 0
      %659 = vmatpush1.bf16.msra.mxu0 0
      %660 = vmatprep.subr.bf16.mxu0 0
      %661 = vmatpush1.bf16.msra.mxu0 0
      %662 = vmatprep.subr.bf16.mxu0 0
      %663 = vmatpush1.bf16.msra.mxu0 0
      %664 = vmatprep.subr.bf16.mxu0 0
      %665 = vmatpush1.bf16.msra.mxu0 0
      %666 = vmatprep.subr.bf16.mxu0 0
      %667 = vmatpush1.bf16.msra.mxu0 0
      %668 = vmatprep.subr.bf16.mxu0 0
      %669 = vmatpush1.bf16.msra.mxu0 0
      %670 = vmatprep.subr.bf16.mxu0 0
      %671 = vmatpush1.bf16.msra.mxu0 0
      %672 = vmatprep.subr.bf16.mxu0 0
      %673 = vmatpush1.bf16.msra.mxu0 0
      %674 = vmatprep.subr.bf16.mxu0 0
      %675 = vmatpush1.bf16.msra.mxu0 0
      %676 = vmatprep.subr.bf16.mxu0 0
      %677 = vmatpush1.bf16.msra.mxu0 0
      %678 = vmatprep.mubr.bf16.mxu0 0
      %679 = vmatmul.mubr.bf16.gmra.mrb[0].mxu0 %v599
      %v680 = vpop.f32.mrb[0].mxu0
      %v681 = vadd.f32 %v571, %v680
      %v682 = vpop.f32.mrb[0].mxu0
      %v683 = vpop.f32.mrb[0].mxu0
      %v684 = vadd.f32 %v571, %v683
      %v685 = vpop.f32.mrb[0].mxu0
      %686 = vmatprep.mubr.bf16.mxu0 0
      %687 = vmatmul.mubr.bf16.gmra.mrb[0].mxu0 %v602
      %v688 = vpop.f32.mrb[0].mxu0
      %v689 = vadd.f32 %v571, %v688
      %v690 = vpop.f32.mrb[0].mxu0
      %v691 = vpop.f32.mrb[0].mxu0
      %v692 = vadd.f32 %v571, %v691
      %v693 = vpop.f32.mrb[0].mxu0
      %694 = vmatprep.mubr.bf16.mxu0 0
      %695 = vmatmul.mubr.bf16.gmra.mrb[0].mxu0 %v605
      %v696 = vpop.f32.mrb[0].mxu0
      %v697 = vadd.f32 %v571, %v696
      %v698 = vpop.f32.mrb[0].mxu0
      %v699 = vpop.f32.mrb[0].mxu0
      %v700 = vadd.f32 %v571, %v699
      %v701 = vpop.f32.mrb[0].mxu0
      %702 = vmatprep.mubr.bf16.mxu0 0
      %703 = vmatmul.mubr.bf16.gmra.mrb[0].mxu0 %v608
      %v704 = vpop.f32.mrb[0].mxu0
      %v705 = vadd.f32 %v571, %v704
      %v706 = vpop.f32.mrb[0].mxu0
      %v707 = vpop.f32.mrb[0].mxu0
      %v708 = vadd.f32 %v571, %v707
      %v709 = vpop.f32.mrb[0].mxu0
      %710 = vmatprep.mubr.bf16.mxu0 0
      %711 = vmatmul.mubr.bf16.gmra.mrb[0].mxu0 %v611
      %v712 = vpop.f32.mrb[0].mxu0
      %v713 = vadd.f32 %v571, %v712
      %v714 = vpop.f32.mrb[0].mxu0
      %v715 = vpop.f32.mrb[0].mxu0
      %v716 = vadd.f32 %v571, %v715
      %v717 = vpop.f32.mrb[0].mxu0
      %718 = vmatprep.mubr.bf16.mxu0 0
      %719 = vmatmul.mubr.bf16.gmra.mrb[0].mxu0 %v614
      %v720 = vpop.f32.mrb[0].mxu0
      %v721 = vadd.f32 %v571, %v720
      %v722 = vpop.f32.mrb[0].mxu0
      %v723 = vpop.f32.mrb[0].mxu0
      %v724 = vadd.f32 %v571, %v723
      %v725 = vpop.f32.mrb[0].mxu0
      %726 = vmatprep.mubr.bf16.mxu0 0
      %727 = vmatmul.mubr.bf16.gmra.mrb[0].mxu0 %v617
      %v728 = vpop.f32.mrb[0].mxu0
      %v729 = vadd.f32 %v571, %v728
      %v730 = vpop.f32.mrb[0].mxu0
      %v731 = vpop.f32.mrb[0].mxu0
      %v732 = vadd.f32 %v571, %v731
      %v733 = vpop.f32.mrb[0].mxu0
      %734 = vmatprep.mubr.bf16.mxu0 0
      %735 = vmatmul.mubr.bf16.gmra.mrb[0].mxu0 %v620
      %v736 = vpop.f32.mrb[0].mxu0
      %v737 = vadd.f32 %v571, %v736
      %v738 = vpop.f32.mrb[0].mxu0
      %v739 = vpop.f32.mrb[0].mxu0
      %v740 = vadd.f32 %v571, %v739
      %v741 = vpop.f32.mrb[0].mxu0
      %742 = vmatprep.mubr.bf16.mxu0 0
      %743 = vmatmul.mubr.bf16.gmra.mrb[0].mxu0 %v623
      %v744 = vpop.f32.mrb[0].mxu0
      %v745 = vadd.f32 %v571, %v744
      %v746 = vpop.f32.mrb[0].mxu0
      %v747 = vpop.f32.mrb[0].mxu0
      %v748 = vadd.f32 %v571, %v747
      %v749 = vpop.f32.mrb[0].mxu0
      %750 = vmatprep.mubr.bf16.mxu0 0
      %751 = vmatmul.mubr.bf16.gmra.mrb[0].mxu0 %v626
      %v752 = vpop.f32.mrb[0].mxu0
      %v753 = vadd.f32 %v571, %v752
      %v754 = vpop.f32.mrb[0].mxu0
      %v755 = vpop.f32.mrb[0].mxu0
      %v756 = vadd.f32 %v571, %v755
      %v757 = vpop.f32.mrb[0].mxu0
      %758 = vmatprep.mubr.bf16.mxu0 0
      %759 = vmatmul.mubr.bf16.gmra.mrb[0].mxu0 %v629
      %v760 = vpop.f32.mrb[0].mxu0
      %v761 = vadd.f32 %v571, %v760
      %v762 = vpop.f32.mrb[0].mxu0
      %v763 = vpop.f32.mrb[0].mxu0
      %v764 = vadd.f32 %v571, %v763
      %v765 = vpop.f32.mrb[0].mxu0
      %766 = vmatprep.mubr.bf16.mxu0 0
      %767 = vmatmul.mubr.bf16.gmra.mrb[0].mxu0 %v632
      %v768 = vpop.f32.mrb[0].mxu0
      %v769 = vadd.f32 %v571, %v768
      %v770 = vpop.f32.mrb[0].mxu0
      %v771 = vpop.f32.mrb[0].mxu0
      %v772 = vadd.f32 %v571, %v771
      %v773 = vpop.f32.mrb[0].mxu0
      %774 = vmatprep.mubr.bf16.mxu0 0
      %775 = vmatmul.mubr.bf16.gmra.mrb[0].mxu0 %v635
      %v776 = vpop.f32.mrb[0].mxu0
      %v777 = vadd.f32 %v571, %v776
      %v778 = vpop.f32.mrb[0].mxu0
      %v779 = vpop.f32.mrb[0].mxu0
      %v780 = vadd.f32 %v571, %v779
      %v781 = vpop.f32.mrb[0].mxu0
      %782 = vmatprep.mubr.bf16.mxu0 0
      %783 = vmatmul.mubr.bf16.gmra.mrb[0].mxu0 %v638
      %v784 = vpop.f32.mrb[0].mxu0
      %v785 = vadd.f32 %v571, %v784
      %v786 = vpop.f32.mrb[0].mxu0
      %v787 = vpop.f32.mrb[0].mxu0
      %v788 = vadd.f32 %v571, %v787
      %v789 = vpop.f32.mrb[0].mxu0
      %790 = vmatprep.mubr.bf16.mxu0 0
      %791 = vmatmul.mubr.bf16.gmra.mrb[0].mxu0 %v641
      %v792 = vpop.f32.mrb[0].mxu0
      %v793 = vadd.f32 %v571, %v792
      %v794 = vpop.f32.mrb[0].mxu0
      %v795 = vpop.f32.mrb[0].mxu0
      %v796 = vadd.f32 %v571, %v795
      %v797 = vpop.f32.mrb[0].mxu0
      %798 = vmatprep.mubr.bf16.mxu0 0
      %799 = vmatmul.mubr.bf16.gmra.mrb[0].mxu0 %v644
      %v800 = vpop.f32.mrb[0].mxu0
      %v801 = vadd.f32 %v571, %v800
      %v802 = vpop.f32.mrb[0].mxu0
      %v803 = vpop.f32.mrb[0].mxu0
      %v804 = vadd.f32 %v571, %v803
      %v805 = vpop.f32.mrb[0].mxu0
      %806 = vdwg.mxu0
      %vm807 = vcmask 80896
      %v808 = vsel %vm807, %v681, -inf
      %809 = vmax.xlane.f32.xlu0 %v808
      %v810 = vpop.xlane.xlu0 %809
      %v811 = vsel %vm807, %v684, -inf
      %812 = vmax.xlane.f32.xlu0 %v811
      %v813 = vpop.xlane.xlu0 %812
      %v814 = vsel %vm807, %v689, -inf
      %815 = vmax.xlane.f32.xlu0 %v814
      %v816 = vpop.xlane.xlu0 %815
      %v817 = vsel %vm807, %v692, -inf
      %818 = vmax.xlane.f32.xlu0 %v817
      %v819 = vpop.xlane.xlu0 %818
      %v820 = vsel %vm807, %v697, -inf
      %821 = vmax.xlane.f32.xlu0 %v820
      %v822 = vpop.xlane.xlu0 %821
      %v823 = vsel %vm807, %v700, -inf
      %824 = vmax.xlane.f32.xlu0 %v823
      %v825 = vpop.xlane.xlu0 %824
      %v826 = vsel %vm807, %v705, -inf
      %827 = vmax.xlane.f32.xlu0 %v826
      %v828 = vpop.xlane.xlu0 %827
      %v829 = vsel %vm807, %v708, -inf
      %830 = vmax.xlane.f32.xlu0 %v829
      %v831 = vpop.xlane.xlu0 %830
      %v832 = vsel %vm807, %v713, -inf
      %833 = vmax.xlane.f32.xlu0 %v832
      %v834 = vpop.xlane.xlu0 %833
      %v835 = vsel %vm807, %v716, -inf
      %836 = vmax.xlane.f32.xlu0 %v835
      %v837 = vpop.xlane.xlu0 %836
      %v838 = vsel %vm807, %v721, -inf
      %839 = vmax.xlane.f32.xlu0 %v838
      %v840 = vpop.xlane.xlu0 %839
      %v841 = vsel %vm807, %v724, -inf
      %842 = vmax.xlane.f32.xlu0 %v841
      %v843 = vpop.xlane.xlu0 %842
      %v844 = vsel %vm807, %v729, -inf
      %845 = vmax.xlane.f32.xlu0 %v844
      %v846 = vpop.xlane.xlu0 %845
      %v847 = vsel %vm807, %v732, -inf
      %848 = vmax.xlane.f32.xlu0 %v847
      %v849 = vpop.xlane.xlu0 %848
      %v850 = vsel %vm807, %v737, -inf
      %851 = vmax.xlane.f32.xlu0 %v850
      %v852 = vpop.xlane.xlu0 %851
      %v853 = vsel %vm807, %v740, -inf
      %854 = vmax.xlane.f32.xlu0 %v853
      %v855 = vpop.xlane.xlu0 %854
      %v856 = vsel %vm807, %v745, -inf
      %857 = vmax.xlane.f32.xlu0 %v856
      %v858 = vpop.xlane.xlu0 %857
      %v859 = vsel %vm807, %v748, -inf
      %860 = vmax.xlane.f32.xlu0 %v859
      %v861 = vpop.xlane.xlu0 %860
      %v862 = vsel %vm807, %v753, -inf
      %863 = vmax.xlane.f32.xlu0 %v862
      %v864 = vpop.xlane.xlu0 %863
      %v865 = vsel %vm807, %v756, -inf
      %866 = vmax.xlane.f32.xlu0 %v865
      %v867 = vpop.xlane.xlu0 %866
      %v868 = vsel %vm807, %v761, -inf
      %869 = vmax.xlane.f32.xlu0 %v868
      %v870 = vpop.xlane.xlu0 %869
      %v871 = vsel %vm807, %v764, -inf
      %872 = vmax.xlane.f32.xlu0 %v871
      %v873 = vpop.xlane.xlu0 %872
      %v874 = vsel %vm807, %v769, -inf
      %875 = vmax.xlane.f32.xlu0 %v874
      %v876 = vpop.xlane.xlu0 %875
      %v877 = vsel %vm807, %v772, -inf
      %878 = vmax.xlane.f32.xlu0 %v877
      %v879 = vpop.xlane.xlu0 %878
      %v880 = vsel %vm807, %v777, -inf
      %881 = vmax.xlane.f32.xlu0 %v880
      %v882 = vpop.xlane.xlu0 %881
      %v883 = vsel %vm807, %v780, -inf
      %884 = vmax.xlane.f32.xlu0 %v883
      %v885 = vpop.xlane.xlu0 %884
      %v886 = vsel %vm807, %v785, -inf
      %887 = vmax.xlane.f32.xlu0 %v886
      %v888 = vpop.xlane.xlu0 %887
      %v889 = vsel %vm807, %v788, -inf
      %890 = vmax.xlane.f32.xlu0 %v889
      %v891 = vpop.xlane.xlu0 %890
      %v892 = vsel %vm807, %v793, -inf
      %893 = vmax.xlane.f32.xlu0 %v892
      %v894 = vpop.xlane.xlu0 %893
      %v895 = vsel %vm807, %v796, -inf
      %896 = vmax.xlane.f32.xlu0 %v895
      %v897 = vpop.xlane.xlu0 %896
      %v898 = vsel %vm807, %v801, -inf
      %899 = vmax.xlane.f32.xlu0 %v898
      %v900 = vpop.xlane.xlu0 %899
      %v901 = vsel %vm807, %v804, -inf
      %902 = vmax.xlane.f32.xlu0 %v901
      %v903 = vpop.xlane.xlu0 %902
      %v904 = vsub.f32 %v681, %v810
      %v905 = vsub.f32 %v684, %v813
      %v906 = vsub.f32 %v689, %v816
      %v907 = vsub.f32 %v692, %v819
      %v908 = vsub.f32 %v697, %v822
      %v909 = vsub.f32 %v700, %v825
      %v910 = vsub.f32 %v705, %v828
      %v911 = vsub.f32 %v708, %v831
      %v912 = vsub.f32 %v713, %v834
      %v913 = vsub.f32 %v716, %v837
      %v914 = vsub.f32 %v721, %v840
      %v915 = vsub.f32 %v724, %v843
      %v916 = vsub.f32 %v729, %v846
      %v917 = vsub.f32 %v732, %v849
      %v918 = vsub.f32 %v737, %v852
      %v919 = vsub.f32 %v740, %v855
      %v920 = vsub.f32 %v745, %v858
      %v921 = vsub.f32 %v748, %v861
      %v922 = vsub.f32 %v753, %v864
      %v923 = vsub.f32 %v756, %v867
      %v924 = vsub.f32 %v761, %v870
      %v925 = vsub.f32 %v764, %v873
      %v926 = vsub.f32 %v769, %v876
      %v927 = vsub.f32 %v772, %v879
      %v928 = vsub.f32 %v777, %v882
      %v929 = vsub.f32 %v780, %v885
      %v930 = vsub.f32 %v785, %v888
      %v931 = vsub.f32 %v788, %v891
      %v932 = vsub.f32 %v793, %v894
      %v933 = vsub.f32 %v796, %v897
      %v934 = vsub.f32 %v801, %v900
      %v935 = vsub.f32 %v804, %v903
      %v936 = vmul.f32 %v904, 1.442695
      %v937 = vpow.pop %v936
      %v938 = vmul.f32 %v905, 1.442695
      %v939 = vpow.pop %v938
      %v940 = vmul.f32 %v906, 1.442695
      %v941 = vpow.pop %v940
      %v942 = vmul.f32 %v907, 1.442695
      %v943 = vpow.pop %v942
      %v944 = vmul.f32 %v908, 1.442695
      %v945 = vpow.pop %v944
      %v946 = vmul.f32 %v909, 1.442695
      %v947 = vpow.pop %v946
      %v948 = vmul.f32 %v910, 1.442695
      %v949 = vpow.pop %v948
      %v950 = vmul.f32 %v911, 1.442695
      %v951 = vpow.pop %v950
      %v952 = vmul.f32 %v912, 1.442695
      %v953 = vpow.pop %v952
      %v954 = vmul.f32 %v913, 1.442695
      %v955 = vpow.pop %v954
      %v956 = vmul.f32 %v914, 1.442695
      %v957 = vpow.pop %v956
      %v958 = vmul.f32 %v915, 1.442695
      %v959 = vpow.pop %v958
      %v960 = vmul.f32 %v916, 1.442695
      %v961 = vpow.pop %v960
      %v962 = vmul.f32 %v917, 1.442695
      %v963 = vpow.pop %v962
      %v964 = vmul.f32 %v918, 1.442695
      %v965 = vpow.pop %v964
      %v966 = vmul.f32 %v919, 1.442695
      %v967 = vpow.pop %v966
      %v968 = vmul.f32 %v920, 1.442695
      %v969 = vpow.pop %v968
      %v970 = vmul.f32 %v921, 1.442695
      %v971 = vpow.pop %v970
      %v972 = vmul.f32 %v922, 1.442695
      %v973 = vpow.pop %v972
      %v974 = vmul.f32 %v923, 1.442695
      %v975 = vpow.pop %v974
      %v976 = vmul.f32 %v924, 1.442695
      %v977 = vpow.pop %v976
      %v978 = vmul.f32 %v925, 1.442695
      %v979 = vpow.pop %v978
      %v980 = vmul.f32 %v926, 1.442695
      %v981 = vpow.pop %v980
      %v982 = vmul.f32 %v927, 1.442695
      %v983 = vpow.pop %v982
      %v984 = vmul.f32 %v928, 1.442695
      %v985 = vpow.pop %v984
      %v986 = vmul.f32 %v929, 1.442695
      %v987 = vpow.pop %v986
      %v988 = vmul.f32 %v930, 1.442695
      %v989 = vpow.pop %v988
      %v990 = vmul.f32 %v931, 1.442695
      %v991 = vpow.pop %v990
      %v992 = vmul.f32 %v932, 1.442695
      %v993 = vpow.pop %v992
      %v994 = vmul.f32 %v933, 1.442695
      %v995 = vpow.pop %v994
      %v996 = vmul.f32 %v934, 1.442695
      %v997 = vpow.pop %v996
      %v998 = vmul.f32 %v935, 1.442695
      %v999 = vpow.pop %v998
      %v1000 = vsel %vm807, %v937, 0.0
      %1001 = vadd.xlane.f32.xlu0 %v1000
      %v1002 = vpop.xlane.xlu0 %1001
      %v1003 = vsel %vm807, %v939, 0.0
      %1004 = vadd.xlane.f32.xlu0 %v1003
      %v1005 = vpop.xlane.xlu0 %1004
      %v1006 = vsel %vm807, %v941, 0.0
      %1007 = vadd.xlane.f32.xlu0 %v1006
      %v1008 = vpop.xlane.xlu0 %1007
      %v1009 = vsel %vm807, %v943, 0.0
      %1010 = vadd.xlane.f32.xlu0 %v1009
      %v1011 = vpop.xlane.xlu0 %1010
      %v1012 = vsel %vm807, %v945, 0.0
      %1013 = vadd.xlane.f32.xlu0 %v1012
      %v1014 = vpop.xlane.xlu0 %1013
      %v1015 = vsel %vm807, %v947, 0.0
      %1016 = vadd.xlane.f32.xlu0 %v1015
      %v1017 = vpop.xlane.xlu0 %1016
      %v1018 = vsel %vm807, %v949, 0.0
      %1019 = vadd.xlane.f32.xlu0 %v1018
      %v1020 = vpop.xlane.xlu0 %1019
      %v1021 = vsel %vm807, %v951, 0.0
      %1022 = vadd.xlane.f32.xlu0 %v1021
      %v1023 = vpop.xlane.xlu0 %1022
      %v1024 = vsel %vm807, %v953, 0.0
      %1025 = vadd.xlane.f32.xlu0 %v1024
      %v1026 = vpop.xlane.xlu0 %1025
      %v1027 = vsel %vm807, %v955, 0.0
      %1028 = vadd.xlane.f32.xlu0 %v1027
      %v1029 = vpop.xlane.xlu0 %1028
      %v1030 = vsel %vm807, %v957, 0.0
      %1031 = vadd.xlane.f32.xlu0 %v1030
      %v1032 = vpop.xlane.xlu0 %1031
      %v1033 = vsel %vm807, %v959, 0.0
      %1034 = vadd.xlane.f32.xlu0 %v1033
      %v1035 = vpop.xlane.xlu0 %1034
      %v1036 = vsel %vm807, %v961, 0.0
      %1037 = vadd.xlane.f32.xlu0 %v1036
      %v1038 = vpop.xlane.xlu0 %1037
      %v1039 = vsel %vm807, %v963, 0.0
      %1040 = vadd.xlane.f32.xlu0 %v1039
      %v1041 = vpop.xlane.xlu0 %1040
      %v1042 = vsel %vm807, %v965, 0.0
      %1043 = vadd.xlane.f32.xlu0 %v1042
      %v1044 = vpop.xlane.xlu0 %1043
      %v1045 = vsel %vm807, %v967, 0.0
      %1046 = vadd.xlane.f32.xlu0 %v1045
      %v1047 = vpop.xlane.xlu0 %1046
      %v1048 = vsel %vm807, %v969, 0.0
      %1049 = vadd.xlane.f32.xlu0 %v1048
      %v1050 = vpop.xlane.xlu0 %1049
      %v1051 = vsel %vm807, %v971, 0.0
      %1052 = vadd.xlane.f32.xlu0 %v1051
      %v1053 = vpop.xlane.xlu0 %1052
      %v1054 = vsel %vm807, %v973, 0.0
      %1055 = vadd.xlane.f32.xlu0 %v1054
      %v1056 = vpop.xlane.xlu0 %1055
      %v1057 = vsel %vm807, %v975, 0.0
      %1058 = vadd.xlane.f32.xlu0 %v1057
      %v1059 = vpop.xlane.xlu0 %1058
      %v1060 = vsel %vm807, %v977, 0.0
      %1061 = vadd.xlane.f32.xlu0 %v1060
      %v1062 = vpop.xlane.xlu0 %1061
      %v1063 = vsel %vm807, %v979, 0.0
      %1064 = vadd.xlane.f32.xlu0 %v1063
      %v1065 = vpop.xlane.xlu0 %1064
      %v1066 = vsel %vm807, %v981, 0.0
      %1067 = vadd.xlane.f32.xlu0 %v1066
      %v1068 = vpop.xlane.xlu0 %1067
      %v1069 = vsel %vm807, %v983, 0.0
      %1070 = vadd.xlane.f32.xlu0 %v1069
      %v1071 = vpop.xlane.xlu0 %1070
      %v1072 = vsel %vm807, %v985, 0.0
      %1073 = vadd.xlane.f32.xlu0 %v1072
      %v1074 = vpop.xlane.xlu0 %1073
      %v1075 = vsel %vm807, %v987, 0.0
      %1076 = vadd.xlane.f32.xlu0 %v1075
      %v1077 = vpop.xlane.xlu0 %1076
      %v1078 = vsel %vm807, %v989, 0.0
      %1079 = vadd.xlane.f32.xlu0 %v1078
      %v1080 = vpop.xlane.xlu0 %1079
      %v1081 = vsel %vm807, %v991, 0.0
      %1082 = vadd.xlane.f32.xlu0 %v1081
      %v1083 = vpop.xlane.xlu0 %1082
      %v1084 = vsel %vm807, %v993, 0.0
      %1085 = vadd.xlane.f32.xlu0 %v1084
      %v1086 = vpop.xlane.xlu0 %1085
      %v1087 = vsel %vm807, %v995, 0.0
      %1088 = vadd.xlane.f32.xlu0 %v1087
      %v1089 = vpop.xlane.xlu0 %1088
      %v1090 = vsel %vm807, %v997, 0.0
      %1091 = vadd.xlane.f32.xlu0 %v1090
      %v1092 = vpop.xlane.xlu0 %1091
      %v1093 = vsel %vm807, %v999, 0.0
      %1094 = vadd.xlane.f32.xlu0 %v1093
      %v1095 = vpop.xlane.xlu0 %1094
      %v1096 = vrcp.pop %v1002
      %v1097 = vmul.f32 %v937, %v1096
      %v1098 = vrcp.pop %v1005
      %v1099 = vmul.f32 %v939, %v1098
      %v1100 = vrcp.pop %v1008
      %v1101 = vmul.f32 %v941, %v1100
      %v1102 = vrcp.pop %v1011
      %v1103 = vmul.f32 %v943, %v1102
      %v1104 = vrcp.pop %v1014
      %v1105 = vmul.f32 %v945, %v1104
      %v1106 = vrcp.pop %v1017
      %v1107 = vmul.f32 %v947, %v1106
      %v1108 = vrcp.pop %v1020
      %v1109 = vmul.f32 %v949, %v1108
      %v1110 = vrcp.pop %v1023
      %v1111 = vmul.f32 %v951, %v1110
      %v1112 = vrcp.pop %v1026
      %v1113 = vmul.f32 %v953, %v1112
      %v1114 = vrcp.pop %v1029
      %v1115 = vmul.f32 %v955, %v1114
      %v1116 = vrcp.pop %v1032
      %v1117 = vmul.f32 %v957, %v1116
      %v1118 = vrcp.pop %v1035
      %v1119 = vmul.f32 %v959, %v1118
      %v1120 = vrcp.pop %v1038
      %v1121 = vmul.f32 %v961, %v1120
      %v1122 = vrcp.pop %v1041
      %v1123 = vmul.f32 %v963, %v1122
      %v1124 = vrcp.pop %v1044
      %v1125 = vmul.f32 %v965, %v1124
      %v1126 = vrcp.pop %v1047
      %v1127 = vmul.f32 %v967, %v1126
      %v1128 = vrcp.pop %v1050
      %v1129 = vmul.f32 %v969, %v1128
      %v1130 = vrcp.pop %v1053
      %v1131 = vmul.f32 %v971, %v1130
      %v1132 = vrcp.pop %v1056
      %v1133 = vmul.f32 %v973, %v1132
      %v1134 = vrcp.pop %v1059
      %v1135 = vmul.f32 %v975, %v1134
      %v1136 = vrcp.pop %v1062
      %v1137 = vmul.f32 %v977, %v1136
      %v1138 = vrcp.pop %v1065
      %v1139 = vmul.f32 %v979, %v1138
      %v1140 = vrcp.pop %v1068
      %v1141 = vmul.f32 %v981, %v1140
      %v1142 = vrcp.pop %v1071
      %v1143 = vmul.f32 %v983, %v1142
      %v1144 = vrcp.pop %v1074
      %v1145 = vmul.f32 %v985, %v1144
      %v1146 = vrcp.pop %v1077
      %v1147 = vmul.f32 %v987, %v1146
      %v1148 = vrcp.pop %v1080
      %v1149 = vmul.f32 %v989, %v1148
      %v1150 = vrcp.pop %v1083
      %v1151 = vmul.f32 %v991, %v1150
      %v1152 = vrcp.pop %v1086
      %v1153 = vmul.f32 %v993, %v1152
      %v1154 = vrcp.pop %v1089
      %v1155 = vmul.f32 %v995, %v1154
      %v1156 = vrcp.pop %v1092
      %v1157 = vmul.f32 %v997, %v1156
      %v1158 = vrcp.pop %v1095
      %v1159 = vmul.f32 %v999, %v1158
      %1160 = vst.msk [vmem:[%s226] sm:$0xff] %vm807, %v1097
      %1161 = vst.msk [vmem:[%s226 + $0x8] sm:$0xff] %vm807, %v1099
      %1162 = vst.msk [vmem:[%s226 + $0x10] sm:$0xff] %vm807, %v1101
      %1163 = vst.msk [vmem:[%s226 + $0x18] sm:$0xff] %vm807, %v1103
      %1164 = vst.msk [vmem:[%s226 + $0x20] sm:$0xff] %vm807, %v1105
      %1165 = vst.msk [vmem:[%s226 + $0x28] sm:$0xff] %vm807, %v1107
      %1166 = vst.msk [vmem:[%s226 + $0x30] sm:$0xff] %vm807, %v1109
      %1167 = vst.msk [vmem:[%s226 + $0x38] sm:$0xff] %vm807, %v1111
      %1168 = vst.msk [vmem:[%s226 + $0x40] sm:$0xff] %vm807, %v1113
      %1169 = vst.msk [vmem:[%s226 + $0x48] sm:$0xff] %vm807, %v1115
      %1170 = vst.msk [vmem:[%s226 + $0x50] sm:$0xff] %vm807, %v1117
      %1171 = vst.msk [vmem:[%s226 + $0x58] sm:$0xff] %vm807, %v1119
      %1172 = vst.msk [vmem:[%s226 + $0x60] sm:$0xff] %vm807, %v1121
      %1173 = vst.msk [vmem:[%s226 + $0x68] sm:$0xff] %vm807, %v1123
      %1174 = vst.msk [vmem:[%s226 + $0x70] sm:$0xff] %vm807, %v1125
      %1175 = vst.msk [vmem:[%s226 + $0x78] sm:$0xff] %vm807, %v1127
      %1176 = vst.msk [vmem:[%s226 + $0x80] sm:$0xff] %vm807, %v1129
      %1177 = vst.msk [vmem:[%s226 + $0x88] sm:$0xff] %vm807, %v1131
      %1178 = vst.msk [vmem:[%s226 + $0x90] sm:$0xff] %vm807, %v1133
      %1179 = vst.msk [vmem:[%s226 + $0x98] sm:$0xff] %vm807, %v1135
      %1180 = vst.msk [vmem:[%s226 + $0xa0] sm:$0xff] %vm807, %v1137
      %1181 = vst.msk [vmem:[%s226 + $0xa8] sm:$0xff] %vm807, %v1139
      %1182 = vst.msk [vmem:[%s226 + $0xb0] sm:$0xff] %vm807, %v1141
      %1183 = vst.msk [vmem:[%s226 + $0xb8] sm:$0xff] %vm807, %v1143
      %1184 = vst.msk [vmem:[%s226 + $0xc0] sm:$0xff] %vm807, %v1145
      %1185 = vst.msk [vmem:[%s226 + $0xc8] sm:$0xff] %vm807, %v1147
      %1186 = vst.msk [vmem:[%s226 + $0xd0] sm:$0xff] %vm807, %v1149
      %1187 = vst.msk [vmem:[%s226 + $0xd8] sm:$0xff] %vm807, %v1151
      %1188 = vst.msk [vmem:[%s226 + $0xe0] sm:$0xff] %vm807, %v1153
      %1189 = vst.msk [vmem:[%s226 + $0xe8] sm:$0xff] %vm807, %v1155
      %1190 = vst.msk [vmem:[%s226 + $0xf0] sm:$0xff] %vm807, %v1157
      %1191 = vst.msk [vmem:[%s226 + $0xf8] sm:$0xff] %vm807, %v1159
      %s1192 = smul.u32 32, %s16
      %p1193 = scmp.lt.s32.totalorder %s1192, 159
      %s1194 = scalar_select %p1193, %s1192, 159
      %s1195 = smul.addr %s1194, 8
      %s1196 = scalar_lea.vmem %s5, %s1195
      // Predicated region
      $region41: #{tpu_custom_call.1} parent=39 // pred_check
        %p1197 = pneg %p144
      $region42: #{tpu_custom_call.1} parent=39 // pred_check_branch
        %1199 = sbr.rel (%p1197) target = $region44
      $region43: #{tpu_custom_call.1} parent=39 // pred_region
        %s1200 = smul.u32 32, %s16
      $region44: #{tpu_custom_call.1} parent=39 // pred_fallthru
        _
    $region40: #{tpu_custom_call.1} parent=5 // pred_fallthru
      _
    %p1201 = scmp.le.s32.totalorder 2, %s11
    // Predicated region
    $region45: #{tpu_custom_call.1} parent=5 // pred_check
      %p1202 = pneg %p1201
    $region46: #{tpu_custom_call.1} parent=5 // pred_check_branch
      %1204 = sbr.rel (%p1202) target = $region48
    $region47: #{tpu_custom_call.1} parent=5 // pred_region
      %s1205 = ssub.s32 %s11, 2
      // Predicated region
      $region49: #{tpu_custom_call.1} parent=47 // pred_check
        %p1206 = pneg %p150
      $region50: #{tpu_custom_call.1} parent=47 // pred_check_branch
        %1208 = sbr.rel (%p1206) target = $region52
      $region51: #{tpu_custom_call.1} parent=47 // pred_region
        %s1209 = smul.u32 32, %s17
        %p1210 = scmp.lt.s32.totalorder %s1209, 159
        %s1211 = scalar_select %p1210, %s1209, 159
        %s1212 = smul.addr %s1211, 8
        %s1213 = scalar_lea.vmem %s5, %s1212
      $region52: #{tpu_custom_call.1} parent=47 // pred_fallthru
        _
    $region48: #{tpu_custom_call.1} parent=5 // pred_fallthru
      _
  $region6: #{tpu_custom_call.1} parent=0 // loop_footer
    %s15 = sadd.s32 1, %s11
  $region7: #{tpu_custom_call.1} parent=0 // loop_footer_branch
    %10 = sbr.rel target = $region3
  $region8: #{tpu_custom_call.1} parent=0 // loop_exit
    _

</llo_original>
